<compile_context>
chip_gen: v7x
topology: tpu7x:2x2x1
jax: 0.10.0
libtpu: 0.0.40
codegen_flags: <defaults>
</compile_context>

<pallas_src>
import functools

import jax
import jax.numpy as jnp
from jax.experimental import pallas as pl
from jax.experimental.pallas import tpu as pltpu


def _cdiv(a, b):
    return -(-a // b)


def _round_up(x, m):
    return _cdiv(x, m) * m


def _linear_kernel(x_ref, w_ref, b_ref, o_ref):
    # x_ref: (tB, E)   w_ref: (E, L)   b_ref: (1, L) f32   o_ref: (tB, L)
    # In-kernel cast to the weight's compute dtype (no-op for f32, free VPU op for bf16).
    x = x_ref[...].astype(w_ref.dtype)
    # MXU matmul with f32 accumulation; bias add in f32 (no bf16 VPU path needed — v5e safe).
    acc = jnp.dot(x, w_ref[...], preferred_element_type=jnp.float32)
    o_ref[...] = (acc + b_ref[...]).astype(o_ref.dtype)


def prepare_params(weight, bias, compute_dtype=jnp.bfloat16):
    """One-time parameter prep (call outside the forward path).

    weight: (L, E) float32, PyTorch nn.Linear layout.
    bias:   (L,)   float32.
    Returns (w_t (E, L) in compute_dtype, bias (1, L) f32). Transpose is hoisted here;
    no lane padding — the label dim stays at its true size so output stores are narrow.
    """
    w_t = weight.T.astype(compute_dtype)                  # (E, L)
    b2d = bias.astype(jnp.float32).reshape(1, -1)         # (1, L), f32
    return w_t, b2d


@functools.partial(jax.jit, static_argnames=("tile_b", "out_dtype"))
def question_classifier_forward(x, w_t, b2d, *, tile_b=2048, out_dtype=jnp.float32):
    """x: (B, E) any float dtype. w_t: (E, L). b2d: (1, L) f32. Returns (B, L) out_dtype."""
    B, E = x.shape
    E_w, L = w_t.shape
    if E_w != E:
        raise ValueError(f"embedding dim mismatch: x has {E}, weight has {E_w}")

    x_bytes = jnp.dtype(x.dtype).itemsize
    w_bytes = jnp.dtype(w_t.dtype).itemsize
    o_bytes = jnp.dtype(out_dtype).itemsize

    # Batch tile: multiple of 32 (native sublane boundary for f32/bf16/int8), at most
    # ceil(B/2) so the grid has >=2 steps whenever B allows (megacore on v7x).
    tB = min(_round_up(tile_b, 32), _round_up(max(_cdiv(B, 2), 1), 32))
    tB = max(tB, 32)

    # Keep the streaming footprint under a cap that is safe on every generation
    # (v7x: 64 MiB per TC; v5e/v6e: 128 MiB). Resident weight/bias + up to 3 x-buffers
    # + double-buffered narrow output + headroom.
    vmem_cap = 48 << 20
    resident = E * L * w_bytes + L * 4

    def _stream_bytes(t):
        return 3 * t * E * x_bytes + 2 * t * L * o_bytes

    while tB > 32 and resident + _stream_bytes(tB) + (1 << 20) > vmem_cap:
        tB = max(32, _round_up(tB // 2, 32))

    grid_b = _cdiv(B, tB)
    vmem_limit = int(min(max(resident + _stream_bytes(tB) + (1 << 20), 4 << 20), vmem_cap))

    # Deeper buffering on the x stream only pays when the grid is long enough.
    if grid_b >= 3:
        x_spec = pl.BlockSpec((tB, E), lambda i: (i, 0), pipeline_mode=pl.Buffered(3))
    else:
        x_spec = pl.BlockSpec((tB, E), lambda i: (i, 0))

    cost = pl.CostEstimate(
        flops=2 * B * E * L,
        bytes_accessed=B * E * x_bytes + E * L * w_bytes + L * 4 + B * L * o_bytes,
        transcendentals=0,
    )

    out = pl.pallas_call(
        _linear_kernel,
        out_shape=jax.ShapeDtypeStruct((B, L), out_dtype),
        grid_spec=pltpu.PrefetchScalarGridSpec(
            num_scalar_prefetch=0,
            grid=(grid_b,),
            in_specs=[
                x_spec,                                     # batch tile (partial last block OK)
                pl.BlockSpec((E, L), lambda i: (0, 0)),     # weight resident across grid
                pl.BlockSpec((1, L), lambda i: (0, 0)),     # bias resident across grid
            ],
            out_specs=pl.BlockSpec((tB, L), lambda i: (i, 0)),  # narrow (num_labels) output
        ),
        compiler_params=pltpu.CompilerParams(
            dimension_semantics=("parallel",),              # megacore split on v7x
            vmem_limit_bytes=vmem_limit,
        ),
        cost_estimate=cost,
    )(x, w_t, b2d)

    return out


def question_classifier_ref(x, weight, bias):
    return x @ weight.T + bias[None, :]


if __name__ == "__main__":
    # Small shapes consistent with the module: word_embedding_dim=32, num_labels=8, batch=2.
    key = jax.random.PRNGKey(0)
    k_x, k_w, k_b = jax.random.split(key, 3)

    batch = 2
    embedding_dim = 32
    num_labels = 8

    x = jax.random.normal(k_x, (batch, embedding_dim), dtype=jnp.float32)
    # Deterministic init mimicking nn.Linear's uniform(-1/sqrt(E), 1/sqrt(E)).
    bound = 1.0 / (embedding_dim ** 0.5)
    weight = jax.random.uniform(k_w, (num_labels, embedding_dim),
                                minval=-bound, maxval=bound, dtype=jnp.float32)
    bias = jax.random.uniform(k_b, (num_labels,),
                              minval=-bound, maxval=bound, dtype=jnp.float32)

    # f32 params here to keep the tight tolerance check; use the bf16 default of
    # prepare_params (and bf16-stored x / bf16 logits) at real hidden sizes for the
    # HBM-bandwidth win. Tolerance must be loosened (~2e-2) on the bf16 path.
    w_t, b2d = prepare_params(weight, bias, compute_dtype=jnp.float32)

    out = question_classifier_forward(x, w_t, b2d)
    out = jax.block_until_ready(out)

    ref = question_classifier_ref(x, weight, bias)
    assert out.shape == (batch, num_labels)
    assert jnp.allclose(out, ref, atol=1e-5, rtol=1e-5), "mismatch vs reference"

    print("KERNEL_OK")
</pallas_src>

<mosaic_0001>
module attributes {stable_mosaic.version = 11 : i64} {
  func.func @_linear_kernel(%arg0: i32, %arg1: memref<32x32xf32, #tpu.memory_space<vmem>>, %arg2: memref<32x8xf32, #tpu.memory_space<vmem>>, %arg3: memref<1x8xf32, #tpu.memory_space<vmem>>, %arg4: memref<32x8xf32, #tpu.memory_space<vmem>>) attributes {dimension_semantics = [#tpu.dimension_semantics<parallel>], iteration_bounds = array<i64: 1>, scalar_prefetch = 0 : i64, scratch_operands = 0 : i64, tpu.core_type = #tpu.core_type<tc>, window_params = [{transform_indices = @transform_0, window_bounds = array<i64: 32, 32>}, {pipeline_mode = #tpu.pipeline_mode<synchronous>, transform_indices = @transform_1, window_bounds = array<i64: 32, 8>}, {pipeline_mode = #tpu.pipeline_mode<synchronous>, transform_indices = @transform_2, window_bounds = array<i64: 1, 8>}, {transform_indices = @transform_3, window_bounds = array<i64: 32, 8>}]} {
    %c0 = arith.constant 0 : index
    %c0_0 = arith.constant 0 : index
    %0 = vector.load %arg1[%c0, %c0_0] : memref<32x32xf32, #tpu.memory_space<vmem>>, vector<32x32xf32>
    %c0_1 = arith.constant 0 : index
    %c0_2 = arith.constant 0 : index
    %1 = vector.load %arg2[%c0_1, %c0_2] : memref<32x8xf32, #tpu.memory_space<vmem>>, vector<32x8xf32>
    %cst = arith.constant dense<0.000000e+00> : vector<32x8xf32>
    %2 = tpu.matmul %0, %1, %cst {dimension_numbers = #tpu.dot_dimension_numbers<[1], [0], [0], [1], [0, 0, 1, 1], [], []>} : vector<32x32xf32>, vector<32x8xf32>, vector<32x8xf32> -> vector<32x8xf32>
    %c0_3 = arith.constant 0 : index
    %c0_4 = arith.constant 0 : index
    %3 = vector.load %arg3[%c0_3, %c0_4] : memref<1x8xf32, #tpu.memory_space<vmem>>, vector<1x8xf32>
    %4 = vector.broadcast %3 : vector<1x8xf32> to vector<32x8xf32>
    %5 = arith.addf %2, %4 : vector<32x8xf32>
    %c0_5 = arith.constant 0 : index
    %c0_6 = arith.constant 0 : index
    %6 = vector.load %arg4[%c0_5, %c0_6] : memref<32x8xf32, #tpu.memory_space<vmem>>, vector<32x8xf32>
    tpu.vector_store %arg4[%c0_5, %c0_6], %5 {strides = array<i32>} : memref<32x8xf32, #tpu.memory_space<vmem>>, vector<32x8xf32>,
    return
  }
  func.func @transform_0(%arg0: i32) -> (i32, i32) {
    %c0_i32 = arith.constant 0 : i32
    %c0_i32_0 = arith.constant 0 : i32
    return %arg0, %c0_i32 : i32, i32
  }
  func.func @transform_1(%arg0: i32) -> (i32, i32) {
    %c0_i32 = arith.constant 0 : i32
    %c0_i32_0 = arith.constant 0 : i32
    %c0_i32_1 = arith.constant 0 : i32
    return %c0_i32, %c0_i32_0 : i32, i32
  }
  func.func @transform_2(%arg0: i32) -> (i32, i32) {
    %c0_i32 = arith.constant 0 : i32
    %c0_i32_0 = arith.constant 0 : i32
    %c0_i32_1 = arith.constant 0 : i32
    return %c0_i32, %c0_i32_0 : i32, i32
  }
  func.func @transform_3(%arg0: i32) -> (i32, i32) {
    %c0_i32 = arith.constant 0 : i32
    %c0_i32_0 = arith.constant 0 : i32
    return %arg0, %c0_i32 : i32, i32
  }
}

</mosaic_0001>

<llo_original>
// kernel: question_classifier_forward.1
$region0: #{question_classifier_forward.1}
  #allocation0 [shape = 'u32[]', space=smem, size = 0x4, offset = 0x4, fixed_abs, tag = 'smem constant byte address 0x4 - core index']
  #allocation1 [shape = 'u32[144,128]{1,0:T(1,128)}', space=vmem, size = 0x12000, scoped, tag = 'internal scratch']
  %s0 = inlined_call_operand.vmem [shape: f32[2,32], index: 0, kind: input, shape index: {}]
  %s1 = inlined_call_operand.vmem [shape: f32[32,8], index: 1, kind: input, shape index: {}]
  %s2 = inlined_call_operand.vmem [shape: f32[1,8], index: 2, kind: input, shape index: {}]
  %s3 = inlined_call_operand.hbm [shape: f32[2,8], index: 3, kind: output, shape index: {}]
  %s4 = sld [smem:[#allocation0]]
  $region22: #{question_classifier_forward.1} parent=0
    _
  %s6 = ssub.s32 1, %s4
  %s7 = scalar_select 0, %s6, %s4
  $region1: #{question_classifier_forward.1} parent=0
    #allocation2 [shape = 'u8[16384]{0}', space=vmem, size = 0x4000, scoped, tag = 'output window, operand 0, single buffered']
    #allocation3 [shape = 's32[1]{0}', space=sflag, size = 0x4, scoped, tag = 'scoped memory for question_classifier_forward.1']
    %8 = vsyncpa [#allocation3], 0
    // Predicated region
    $region2: #{question_classifier_forward.1} parent=1 // pred_check
      _
    $region3: #{question_classifier_forward.1} parent=1 // pred_check_branch
      %10 = sbr.rel (0) target = $region5
    $region4: #{question_classifier_forward.1} parent=1 // pred_region
      _
    $region5: #{question_classifier_forward.1} parent=1 // pred_fallthru
      _
    // Predicated region
    $region6: #{question_classifier_forward.1} parent=1 // pred_check
      _
    $region7: #{question_classifier_forward.1} parent=1 // pred_check_branch
      %12 = sbr.rel (0) target = $region9
    $region8: #{question_classifier_forward.1} parent=1 // pred_region
      _
    $region9: #{question_classifier_forward.1} parent=1 // pred_fallthru
      _
    // Predicated region
    $region10: #{question_classifier_forward.1} parent=1 // pred_check
      _
    $region11: #{question_classifier_forward.1} parent=1 // pred_check_branch
      %14 = sbr.rel (0) target = $region13
    $region12: #{question_classifier_forward.1} parent=1 // pred_region
      _
    $region13: #{question_classifier_forward.1} parent=1 // pred_fallthru
      _
    %v15 = vld [vmem:[%s0] sm:$0xff]
    %v16 = vld [vmem:[%s0 + $0x8] sm:$0xff]
    %v17 = vld [vmem:[%s0 + $0x10] sm:$0xff]
    %v18 = vld [vmem:[%s0 + $0x18] sm:$0xff]
    %v19 = vld [vmem:[%s1] sm:$0xff]
    %v20 = vld [vmem:[%s1 + $0x8] sm:$0xff]
    %v21 = vld [vmem:[%s1 + $0x10] sm:$0xff]
    %v22 = vld [vmem:[%s1 + $0x18] sm:$0xff]
    %v23 = vld [vmem:[%s2] sm:$0x1]
    %v25 = vlaneseq
    %v26 = vshrl.u32 %v25, 7
    %v27 = vsub.s32 0, %v26
    %v28 = vrot.slane %v23, %v27
    %vm30 = vcmask 261120
    %v32 = vsel %vm30, %v15, 0
    %v35 = vsel %vm30, %v16, 0
    %v38 = vsel %vm30, %v17, 0
    %v41 = vsel %vm30, %v18, 0
    %43 = vmatprep.subr.mxu0 0.0
    %44 = vmatpush1.msra.mxu0 %v19
    %45 = vmatprep.subr.mxu0 0.0
    %46 = vmatpush1.msra.mxu0 %v20
    %47 = vmatprep.subr.mxu0 0.0
    %48 = vmatpush1.msra.mxu0 %v21
    %49 = vmatprep.subr.mxu0 0.0
    %50 = vmatpush1.msra.mxu0 %v22
    %51 = vmatprep.subr.mxu0 0.0
    %52 = vmatpush1.msra.mxu0 0.0
    %53 = vmatprep.subr.mxu0 0.0
    %54 = vmatpush1.msra.mxu0 0.0
    %55 = vmatprep.subr.mxu0 0.0
    %56 = vmatpush1.msra.mxu0 0.0
    %57 = vmatprep.subr.mxu0 0.0
    %58 = vmatpush1.msra.mxu0 0.0
    %59 = vmatprep.subr.mxu0 0.0
    %60 = vmatpush1.msra.mxu0 0.0
    %61 = vmatprep.subr.mxu0 0.0
    %62 = vmatpush1.msra.mxu0 0.0
    %63 = vmatprep.subr.mxu0 0.0
    %64 = vmatpush1.msra.mxu0 0.0
    %65 = vmatprep.subr.mxu0 0.0
    %66 = vmatpush1.msra.mxu0 0.0
    %67 = vmatprep.subr.mxu0 0.0
    %68 = vmatpush1.msra.mxu0 0.0
    %69 = vmatprep.subr.mxu0 0.0
    %70 = vmatpush1.msra.mxu0 0.0
    %71 = vmatprep.subr.mxu0 0.0
    %72 = vmatpush1.msra.mxu0 0.0
    %73 = vmatprep.subr.mxu0 0.0
    %74 = vmatpush1.msra.mxu0 0.0
    %75 = vmatprep.subr.mxu0 0.0
    %76 = vmatpush1.msra.mxu0 0.0
    %77 = vmatprep.subr.mxu0 0.0
    %78 = vmatpush1.msra.mxu0 0.0
    %79 = vmatprep.subr.mxu0 0.0
    %80 = vmatpush1.msra.mxu0 0.0
    %81 = vmatprep.subr.mxu0 0.0
    %82 = vmatpush1.msra.mxu0 0.0
    %83 = vmatprep.subr.mxu0 0.0
    %84 = vmatpush1.msra.mxu0 0.0
    %85 = vmatprep.subr.mxu0 0.0
    %86 = vmatpush1.msra.mxu0 0.0
    %87 = vmatprep.subr.mxu0 0.0
    %88 = vmatpush1.msra.mxu0 0.0
    %89 = vmatprep.subr.mxu0 0.0
    %90 = vmatpush1.msra.mxu0 0.0
    %91 = vmatprep.subr.mxu0 0.0
    %92 = vmatpush1.msra.mxu0 0.0
    %93 = vmatprep.subr.mxu0 0.0
    %94 = vmatpush1.msra.mxu0 0.0
    %95 = vmatprep.subr.mxu0 0.0
    %96 = vmatpush1.msra.mxu0 0.0
    %97 = vmatprep.subr.mxu0 0.0
    %98 = vmatpush1.msra.mxu0 0.0
    %99 = vmatprep.subr.mxu0 0.0
    %100 = vmatpush1.msra.mxu0 0.0
    %101 = vmatprep.subr.mxu0 0.0
    %102 = vmatpush1.msra.mxu0 0.0
    %103 = vmatprep.subr.mxu0 0.0
    %104 = vmatpush1.msra.mxu0 0.0
    %105 = vmatprep.subr.mxu0 0.0
    %106 = vmatpush1.msra.mxu0 0.0
    %107 = vmatprep.mubr.f32.mxu0 0.0
    %108 = vmatmul.mubr.f32.gmra.mrb[0].mxu0 %v32
    %v109 = vpop.f32.mrb[0].mxu0
    %v110 = vadd.f32 %v28, %v109
    %v111 = vpop.f32.mrb[0].mxu0
    %112 = vmatprep.mubr.f32.mxu0 0.0
    %113 = vmatmul.mubr.f32.gmra.mrb[0].mxu0 %v35
    %v114 = vpop.f32.mrb[0].mxu0
    %v115 = vadd.f32 %v28, %v114
    %v116 = vpop.f32.mrb[0].mxu0
    %117 = vmatprep.mubr.f32.mxu0 0.0
    %118 = vmatmul.mubr.f32.gmra.mrb[0].mxu0 %v38
    %v119 = vpop.f32.mrb[0].mxu0
    %v120 = vadd.f32 %v28, %v119
    %v121 = vpop.f32.mrb[0].mxu0
    %122 = vmatprep.mubr.f32.mxu0 0.0
    %123 = vmatmul.mubr.f32.gmra.mrb[0].mxu0 %v41
    %v124 = vpop.f32.mrb[0].mxu0
    %v125 = vadd.f32 %v28, %v124
    %v126 = vpop.f32.mrb[0].mxu0
    %127 = vdwg.mxu0
    %vm128 = vcmask 64512
    %129 = vst.msk [vmem:[#allocation2] sm:$0xff] %vm128, %v110
    %130 = vst.msk [vmem:[#allocation2 + $0x8] sm:$0xff] %vm128, %v115
    %131 = vst.msk [vmem:[#allocation2 + $0x10] sm:$0xff] %vm128, %v120
    %132 = vst.msk [vmem:[#allocation2 + $0x18] sm:$0xff] %vm128, %v125
    // Predicated region
    $region14: #{question_classifier_forward.1} parent=1 // pred_check
      _
    $region15: #{question_classifier_forward.1} parent=1 // pred_check_branch
      %134 = sbr.rel (0) target = $region17
    $region16: #{question_classifier_forward.1} parent=1 // pred_region
      %s136 = ssub.s32 512, 32
      %137 = vsyncadd [#allocation3], %s136
      %s138 = sshll.u32 [#allocation2], 4
      %s139 = int_to_ptr.vmem [resolvable:$true] %s138
      %144 = dma.vmem_to_hbm [thread:$0]  %s139, 32, %s3, [#allocation3], 32, 32, 2
    $region17: #{question_classifier_forward.1} parent=1 // pred_fallthru
      _
    // Predicated region
    $region18: #{question_classifier_forward.1} parent=1 // pred_check
      _
    $region19: #{question_classifier_forward.1} parent=1 // pred_check_branch
      %146 = sbr.rel (0) target = $region21
    $region20: #{question_classifier_forward.1} parent=1 // pred_region
      %147 = dma.done [#allocation3], 512
    $region21: #{question_classifier_forward.1} parent=1 // pred_fallthru
      _
    %148 = vsyncpa [#allocation3], 1

</llo_original>
